<compile_context>
chip_gen: v5e
topology: v5e:2x2
jax: 0.10.0
libtpu: 0.0.40
codegen_flags: <defaults>
</compile_context>

<pallas_src>
import numpy as np
import jax
import jax.numpy as jnp
from jax import lax
from jax.experimental import pallas as pl
from jax.experimental.pallas import tpu as pltpu

MIN_LAGRANGIAN = 0.0
# NOTE: reference threshold is defined for float64 eigenvalues; kept verbatim in f32
# (it then effectively never triggers for O(1) eigenvalues — flagged for validation).
PSEUDOINV_SVAL_THRESH = 1e-12

_LANE = 128                       # lane quantum (vreg width)
_TBL_CAP = 2048                   # max lanes (batch elements) per block
_PER_LANE_BOUND = 4096            # conservative bytes/lane upper bound over all kernels


def _r_up(x, m):
    return -(-int(x) // m) * m


def _flat(batch_shape):
    return int(np.prod(batch_shape, dtype=np.int64)) if len(batch_shape) else 1


def _vmem_capacity_bytes():
    try:
        info = pltpu.get_tpu_info()
        cap = int(getattr(info, "vmem_capacity_bytes", 0) or 0)
        if cap > 0:
            return cap
    except Exception:
        pass
    return 64 * 1024 * 1024       # conservative fallback: v7x per-TensorCore VMEM


_VMEM_CAP = _vmem_capacity_bytes()
_VMEM_LIMIT = max(16 * 1024 * 1024, min((3 * _VMEM_CAP) // 4, 96 * 1024 * 1024))
_BLOCK_BUDGET = _VMEM_LIMIT // 4  # per-step block budget (leaves room for 2x buffering)


def _pick_tbl(B):
    """Lanes per block: multiple of 128, VMEM-budgeted per generation, capped so the
    batch-tile grid keeps >= 2 steps when the batch allows it (2-TC sharding on v7x)."""
    tbl = (_BLOCK_BUDGET // _PER_LANE_BOUND) // _LANE * _LANE
    tbl = int(max(_LANE, min(tbl, _TBL_CAP)))
    if B > _LANE:
        tbl = min(tbl, _r_up(-(-B // 2), _LANE))
    tbl = min(tbl, _r_up(B, _LANE))
    return tbl


# ----------------------------------------------------------------------------
# in-kernel complex matmul helpers (VPU, batch on lanes, 4-mult complex arith)
# ----------------------------------------------------------------------------
def _mul_nn(ar, ai, br, bi):
    """C = A @ B with A:(M,K,L), B:(K,N,L) -> (M,N,L);  L = lane/batch axis."""
    M, K, L = ar.shape
    N = br.shape[1]
    cr = jnp.zeros((M, N, L), jnp.float32)
    ci = jnp.zeros((M, N, L), jnp.float32)
    for k in range(K):                       # static unroll, K <= 8
        akr = ar[:, k:k + 1, :]              # (M,1,L)
        aki = ai[:, k:k + 1, :]
        bkr = br[k:k + 1, :, :]              # (1,N,L)
        bki = bi[k:k + 1, :, :]
        cr = cr + akr * bkr - aki * bki
        ci = ci + akr * bki + aki * bkr
    return cr, ci


def _ksum(x):
    """Sum over the (small) contraction axis 1 via explicit slice adds."""
    acc = x[:, 0:1, :]
    for k in range(1, x.shape[1]):
        acc = acc + x[:, k:k + 1, :]
    return acc


def _mul_nh(ar, ai, br, bi):
    """C = A @ B^H with A:(M,K,L), B:(N,K,L) -> (M,N,L)   (B conjugated in-place)."""
    N = br.shape[0]
    cols_r, cols_i = [], []
    for n in range(N):                       # static unroll, N <= 8
        bnr = br[n:n + 1, :, :]              # (1,K,L)
        bni = bi[n:n + 1, :, :]
        tr = ar * bnr + ai * bni             # Re{a * conj(b)}
        ti = ai * bnr - ar * bni             # Im{a * conj(b)}
        cols_r.append(_ksum(tr))             # (M,1,L)
        cols_i.append(_ksum(ti))
    if N == 1:
        return cols_r[0], cols_i[0]
    return jnp.concatenate(cols_r, axis=1), jnp.concatenate(cols_i, axis=1)


# ----------------------------------------------------------------------------
# Pallas kernels (all lane-parallel; no cross-lane mixing)
# ----------------------------------------------------------------------------
def _k_ab(ar_ref, ai_ref, br_ref, bi_ref, or_ref, oi_ref):
    cr, ci = _mul_nn(ar_ref[...], ai_ref[...], br_ref[...], bi_ref[...])
    or_ref[...] = cr
    oi_ref[...] = ci


def _k_abc(ar_ref, ai_ref, br_ref, bi_ref, c1r_ref, c1i_ref, or_ref, oi_ref):
    pr, pi = _mul_nn(ar_ref[...], ai_ref[...], br_ref[...], bi_ref[...])
    cr, ci = _mul_nn(pr, pi, c1r_ref[...], c1i_ref[...])
    or_ref[...] = cr
    oi_ref[...] = ci


def _k_aah(ar_ref, ai_ref, or_ref, oi_ref):
    ar, ai = ar_ref[...], ai_ref[...]
    cr, ci = _mul_nh(ar, ai, ar, ai)
    or_ref[...] = cr
    oi_ref[...] = ci


def _k_absq(ar_ref, ai_ref, br_ref, bi_ref, or_ref, oi_ref):
    pr, pi = _mul_nn(ar_ref[...], ai_ref[...], br_ref[...], bi_ref[...])
    cr, ci = _mul_nh(pr, pi, pr, pi)
    or_ref[...] = cr
    oi_ref[...] = ci


def _k_amah(ar_ref, ai_ref, mr_ref, mi_ref, or_ref, oi_ref):
    ar, ai = ar_ref[...], ai_ref[...]
    pr, pi = _mul_nn(ar, ai, mr_ref[...], mi_ref[...])
    cr, ci = _mul_nh(pr, pi, ar, ai)
    or_ref[...] = cr
    oi_ref[...] = ci


def _k_abh(ar_ref, ai_ref, br_ref, bi_ref, or_ref, oi_ref):
    cr, ci = _mul_nh(ar_ref[...], ai_ref[...], br_ref[...], bi_ref[...])
    or_ref[...] = cr
    oi_ref[...] = ci


def _k_vupd(p_ref, iar_ref, iai_ref, aar_ref, aai_ref, vtr_ref, vti_ref,
            or_ref, oi_ref):
    """Fused GCN graph-filter V update:
         out = complex_relu( (invR @ vt) ar_c + (R @ vt) ma_c + vt dl_c ) @ recomb
       p_ref (SMEM, (8, C)): rows 0..3 = Re{ar,ma,dl,recomb}, rows 4..7 = Im{...}."""
    vtr = vtr_ref[...]
    vti = vti_ref[...]
    y1r, y1i = _mul_nn(iar_ref[...], iai_ref[...], vtr, vti)
    y2r, y2i = _mul_nn(aar_ref[...], aai_ref[...], vtr, vti)
    accr = jnp.zeros_like(vtr)
    acci = jnp.zeros_like(vti)
    num_ch = p_ref.shape[1]
    for c in range(num_ch):                                   # static unroll (C = 4)
        arr, ari = p_ref[0, c], p_ref[4, c]
        mar, mai = p_ref[1, c], p_ref[5, c]
        dlr, dli = p_ref[2, c], p_ref[6, c]
        rcr, rci = p_ref[3, c], p_ref[7, c]
        tr = (y1r * arr - y1i * ari) + (y2r * mar - y2i * mai) + (vtr * dlr - vti * dli)
        ti = (y1r * ari + y1i * arr) + (y2r * mai + y2i * mar) + (vtr * dli + vti * dlr)
        tr = jnp.maximum(tr, 0.0)                             # complex ReLU
        ti = jnp.maximum(ti, 0.0)
        accr = accr + (tr * rcr - ti * rci)
        acci = acci + (tr * rci + ti * rcr)
    or_ref[...] = accr
    oi_ref[...] = acci


# ----------------------------------------------------------------------------
# host-side runner: lane-tiled grid, parallel semantics, VMEM-budgeted blocks
# ----------------------------------------------------------------------------
def _run(kernel, ins, out_mn, tbl, smem_scalar=None):
    """ins: list of (re, im) pairs, each f32 of shape (M_i, N_i, Bp), Bp % tbl == 0.
       Returns an (re, im) pair of shape (Mo, No, Bp)."""
    Bp = ins[0][0].shape[-1]
    assert Bp % tbl == 0 and Bp % _LANE == 0
    flats, in_specs = [], []
    for re, im in ins:
        m, n = re.shape[0], re.shape[1]
        spec = pl.BlockSpec((m, n, tbl), lambda i: (0, 0, i))
        flats += [re, im]
        in_specs += [spec, spec]
    args = flats
    if smem_scalar is not None:
        in_specs = [pl.BlockSpec(memory_space=pltpu.MemorySpace.SMEM)] + in_specs
        args = [smem_scalar] + flats
    Mo, No = out_mn
    out_spec = pl.BlockSpec((Mo, No, tbl), lambda i: (0, 0, i))
    cr, ci = pl.pallas_call(
        kernel,
        grid=(Bp // tbl,),
        in_specs=in_specs,
        out_specs=(out_spec, out_spec),
        out_shape=(jax.ShapeDtypeStruct((Mo, No, Bp), jnp.float32),
                   jax.ShapeDtypeStruct((Mo, No, Bp), jnp.float32)),
        compiler_params=pltpu.CompilerParams(
            dimension_semantics=("parallel",),     # batch-lane tiles are independent
            vmem_limit_bytes=_VMEM_LIMIT),
    )(*args)
    return cr, ci


def _run_many(kernel, items, out_mns, tbl, smem_scalar=None):
    """Collapse a list of same-shaped op instances into ONE pallas_call by concatenating
       along the lane (batch) axis; falls back to per-item calls if shapes differ."""
    n = len(items)
    shapes0 = tuple(p[0].shape for p in items[0])
    uniform = (all(tuple(p[0].shape for p in it) == shapes0 for it in items)
               and all(mn == out_mns[0] for mn in out_mns))
    if n == 1 or not uniform:
        return [_run(kernel, it, mn, tbl, smem_scalar)
                for it, mn in zip(items, out_mns)]
    n_ops = len(items[0])
    ins = []
    for j in range(n_ops):
        re = jnp.concatenate([it[j][0] for it in items], axis=-1)
        im = jnp.concatenate([it[j][1] for it in items], axis=-1)
        ins.append((re, im))
    cr, ci = _run(kernel, ins, out_mns[0], tbl, smem_scalar)
    Bp = shapes0[0][-1]
    return [(cr[..., i * Bp:(i + 1) * Bp], ci[..., i * Bp:(i + 1) * Bp])
            for i in range(n)]


# ----------------------------------------------------------------------------
# lane-layout conversion helpers (XLA glue kept to chain boundaries only)
# ----------------------------------------------------------------------------
def _to_lane(x, batch_shape, tbl):
    """complex (*batch, M, N) -> (re, im) pair of shape (M, N, Bp)."""
    x = jnp.asarray(x, jnp.complex64)
    x = jnp.broadcast_to(x, tuple(batch_shape) + x.shape[-2:])
    M, N = x.shape[-2:]
    B = _flat(batch_shape)
    xm = jnp.moveaxis(x.reshape((B, M, N)), 0, -1)
    re = jnp.real(xm).astype(jnp.float32)
    im = jnp.imag(xm).astype(jnp.float32)
    Bp = _r_up(B, tbl)
    if Bp != B:
        pad = [(0, 0), (0, 0), (0, Bp - B)]
        re = jnp.pad(re, pad)
        im = jnp.pad(im, pad)
    return re, im


def _to_lane_vec(x, batch_shape, tbl, pad_value=0.0):
    """real (*batch,) -> (Bp,) f32 lane vector (padding value chosen to keep padded
       lanes numerically benign, e.g. noise/maxpow padded with 1)."""
    x = jnp.broadcast_to(jnp.asarray(x, jnp.float32), tuple(batch_shape))
    B = _flat(batch_shape)
    v = x.reshape((B,))
    Bp = _r_up(B, tbl)
    if Bp != B:
        v = jnp.concatenate([v, jnp.full((Bp - B,), pad_value, jnp.float32)])
    return v


def _from_lane(pair, batch_shape):
    re, im = pair
    B = _flat(batch_shape)
    c = lax.complex(re[..., :B], im[..., :B])
    M, N = re.shape[0], re.shape[1]
    return jnp.moveaxis(c, -1, 0).reshape(tuple(batch_shape) + (M, N))


def _lane_to_bl(pair):
    """lane pair -> batch-leading complex (Bp, M, N) for XLA linalg (inv / eigh)."""
    re, im = pair
    return jnp.moveaxis(lax.complex(re, im), -1, 0)


def _bl_to_lane(c):
    c = jnp.moveaxis(jnp.asarray(c, jnp.complex64), 0, -1)
    return jnp.real(c).astype(jnp.float32), jnp.imag(c).astype(jnp.float32)


def _lane_conjT(pair):
    re, im = pair
    return jnp.swapaxes(re, 0, 1), -jnp.swapaxes(im, 0, 1)


def _lane_clean_herm(pair):
    re, im = pair
    return (0.5 * (re + jnp.swapaxes(re, 0, 1)),
            0.5 * (im - jnp.swapaxes(im, 0, 1)))


# ----------------------------------------------------------------------------
# public wrapped ops (used for kernel sanity checks)
# ----------------------------------------------------------------------------
@jax.jit
def cmm(a, b):
    a = jnp.asarray(a, jnp.complex64)
    b = jnp.asarray(b, jnp.complex64)
    batch = jnp.broadcast_shapes(a.shape[:-2], b.shape[:-2])
    tbl = _pick_tbl(_flat(batch))
    out = _run(_k_ab, [_to_lane(a, batch, tbl), _to_lane(b, batch, tbl)],
               (a.shape[-2], b.shape[-1]), tbl)
    return _from_lane(out, batch)


@jax.jit
def cmm3(a, b, c):
    a = jnp.asarray(a, jnp.complex64)
    b = jnp.asarray(b, jnp.complex64)
    c = jnp.asarray(c, jnp.complex64)
    batch = jnp.broadcast_shapes(a.shape[:-2], b.shape[:-2], c.shape[:-2])
    tbl = _pick_tbl(_flat(batch))
    out = _run(_k_abc,
               [_to_lane(a, batch, tbl), _to_lane(b, batch, tbl), _to_lane(c, batch, tbl)],
               (a.shape[-2], c.shape[-1]), tbl)
    return _from_lane(out, batch)


@jax.jit
def cmat_square(a):
    a = jnp.asarray(a, jnp.complex64)
    batch = a.shape[:-2]
    tbl = _pick_tbl(_flat(batch))
    out = _run(_k_aah, [_to_lane(a, batch, tbl)], (a.shape[-2], a.shape[-2]), tbl)
    return _from_lane(out, batch)


@jax.jit
def cmm_absq(a, b):
    a = jnp.asarray(a, jnp.complex64)
    b = jnp.asarray(b, jnp.complex64)
    batch = jnp.broadcast_shapes(a.shape[:-2], b.shape[:-2])
    tbl = _pick_tbl(_flat(batch))
    out = _run(_k_absq, [_to_lane(a, batch, tbl), _to_lane(b, batch, tbl)],
               (a.shape[-2], a.shape[-2]), tbl)
    return _from_lane(out, batch)


@jax.jit
def cmm_amah(a, m):
    a = jnp.asarray(a, jnp.complex64)
    m = jnp.asarray(m, jnp.complex64)
    batch = jnp.broadcast_shapes(a.shape[:-2], m.shape[:-2])
    tbl = _pick_tbl(_flat(batch))
    out = _run(_k_amah, [_to_lane(a, batch, tbl), _to_lane(m, batch, tbl)],
               (a.shape[-2], a.shape[-2]), tbl)
    return _from_lane(out, batch)


@jax.jit
def cmm_abh(a, b):
    a = jnp.asarray(a, jnp.complex64)
    b = jnp.asarray(b, jnp.complex64)
    batch = jnp.broadcast_shapes(a.shape[:-2], b.shape[:-2])
    tbl = _pick_tbl(_flat(batch))
    out = _run(_k_abh, [_to_lane(a, batch, tbl), _to_lane(b, batch, tbl)],
               (a.shape[-2], b.shape[-2]), tbl)
    return _from_lane(out, batch)


def cmm_ahma(h, m):
    """H^H @ M @ H (congruence): routed through the AMAH kernel with A = H^H."""
    return cmm_amah(conjT(h), m)


@jax.jit
def graph_filter_v_update(inv_aug, aug, vt, packed_params):
    inv_aug = jnp.asarray(inv_aug, jnp.complex64)
    aug = jnp.asarray(aug, jnp.complex64)
    vt = jnp.asarray(vt, jnp.complex64)
    batch = jnp.broadcast_shapes(inv_aug.shape[:-2], aug.shape[:-2], vt.shape[:-2])
    tbl = _pick_tbl(_flat(batch))
    out = _run(_k_vupd,
               [_to_lane(inv_aug, batch, tbl), _to_lane(aug, batch, tbl),
                _to_lane(vt, batch, tbl)],
               (vt.shape[-2], vt.shape[-1]), tbl,
               smem_scalar=jnp.asarray(packed_params, jnp.float32))
    return _from_lane(out, batch)


def _pack_filter_params(params):
    """Pack the shared graph-filter weights into an (8, C) f32 SMEM table."""
    stk = jnp.stack([params['v_param_ar'].reshape(-1),
                     params['v_param_ma'].reshape(-1),
                     params['v_param_diagload'].reshape(-1),
                     params['v_param_recomb'].reshape(-1)], axis=0)
    return jnp.concatenate([jnp.real(stk), jnp.imag(stk)], axis=0).astype(jnp.float32)


# ----------------------------------------------------------------------------
# util.* helpers (plain-JAX glue)
# ----------------------------------------------------------------------------
def conjT(a):
    return jnp.conjugate(jnp.swapaxes(a, -2, -1))


def clean_hermitian(a):
    return 0.5 * (a + conjT(a))


def bf_mat_pow(v):
    return jnp.sum(jnp.real(v) ** 2 + jnp.imag(v) ** 2, axis=(-2, -1))


def complex_relu(z):
    return lax.complex(jnp.maximum(jnp.real(z), 0.0), jnp.maximum(jnp.imag(z), 0.0))


def cinv_hermitian(a):
    """Complex matrix inverse via the real 2n x 2n embedding.
    TODO(synk): reference runs torch.linalg.inv in float64; float32 here may lose
    accuracy for near-singular W^-1 = I - U^H H V (no native f64 on TPU)."""
    n = a.shape[-1]
    ar, ai = jnp.real(a), jnp.imag(a)
    m = jnp.concatenate([jnp.concatenate([ar, -ai], axis=-1),
                         jnp.concatenate([ai, ar], axis=-1)], axis=-2)
    minv = jnp.linalg.inv(m)
    return lax.complex(minv[..., :n, :n], minv[..., n:, :n])


def rationalfct_solve_0d2(c, lam, num_iter=8):
    """Solve sum_i c_i / (lam_i + mu)^2 = 1 for mu >= 0 (reduction over axis 0), bisection.
    TODO(synk): util.rationalfct_solve_0d2 source not provided; standard WMMSE
    Lagrangian bisection reconstructed with `num_iter` iterations."""
    c = jnp.maximum(c, 0.0)
    hi = jnp.sqrt(jnp.maximum(jnp.sum(c, axis=0), 0.0)) + 1e-12
    lo = jnp.zeros_like(hi)

    def f(mu):
        den = lam + mu
        return jnp.sum(c / jnp.maximum(den * den, 1e-30), axis=0)

    def body(_, carry):
        lo_, hi_ = carry
        mid = 0.5 * (lo_ + hi_)
        gt = f(mid) > 1.0
        return jnp.where(gt, mid, lo_), jnp.where(gt, hi_, mid)

    lo, hi = lax.fori_loop(0, num_iter, body, (lo, hi))
    mu = 0.5 * (lo + hi)
    return jnp.where(f(jnp.zeros_like(mu)) <= 1.0, 0.0, mu)


def randcn(key, shape):
    kr, ki = jax.random.split(key)
    return ((jax.random.normal(kr, shape, jnp.float32)
             + 1j * jax.random.normal(ki, shape, jnp.float32)) / np.sqrt(2.0)
            ).astype(jnp.complex64)


# ----------------------------------------------------------------------------
# algo.downlink_mrc (initial beamformers)
# ----------------------------------------------------------------------------
def downlink_mrc(scn):
    # TODO(synk): algo.downlink_mrc source not provided; standard per-BS
    # power-normalized maximum-ratio beamforming initialization.
    v = [None] * scn['num_users']
    for ib in range(scn['num_bss']):
        assigned = scn['bss_assign'][ib]
        share = scn['bss_pow'][..., ib] / float(len(assigned))
        for iu in assigned:
            h = scn['channels'][ib][iu]                       # (*batch, ud, bd)
            v_u = conjT(h)                                    # (*batch, bd, ud)
            p = bf_mat_pow(v_u)
            scale = jnp.sqrt(share / jnp.maximum(p, 1e-12))
            v[iu] = v_u * scale[..., None, None]
    return v


# ----------------------------------------------------------------------------
# GCNWMMSELayer.forward (inference mode, default config) — lane layout throughout
# ----------------------------------------------------------------------------
def gcnwmmse_layer_lane(cfg, lanes, params_packed, v_in, tbl, lagrangian_max_iter=8):
    U = cfg['num_users']
    NB = cfg['num_bss']
    users_dim = cfg['users_dim']
    bss_dim = cfg['bss_dim']
    assigned_bs = cfg['users_assign']
    bss_assign = cfg['bss_assign']
    h = lanes['h']
    hh = lanes['hh']
    noise = lanes['noise']
    rw = lanes['rw']
    maxpow = lanes['maxpow']

    # per-BS concatenation of assigned users' beamformers (columns = streams)
    vcat = []
    for ib in range(NB):
        vr = jnp.concatenate([v_in[j][0] for j in bss_assign[ib]], axis=1)
        vi = jnp.concatenate([v_in[j][1] for j in bss_assign[ib]], axis=1)
        vcat.append((vr, vi))

    # ---- downlink covariance partials (H Vcat)(H Vcat)^H for all (user, bs) ----
    items = [[h[ib][iu], vcat[ib]] for iu in range(U) for ib in range(NB)]
    omns = [(users_dim[iu], users_dim[iu]) for iu in range(U) for ib in range(NB)]
    parts = _run_many(_k_absq, items, omns, tbl)

    inv_cov = []
    for iu in range(U):
        ud = users_dim[iu]
        sr, si = parts[iu * NB]
        for ib in range(1, NB):
            sr = sr + parts[iu * NB + ib][0]
            si = si + parts[iu * NB + ib][1]
        eye = jnp.eye(ud, dtype=jnp.float32)[:, :, None]
        sr = sr + eye * noise[iu][None, None, :]
        pair = _lane_clean_herm((sr, si))
        # TODO(synk): torch.linalg.inv has no Pallas equivalent; XLA inverse used.
        invc = clean_hermitian(cinv_hermitian(_lane_to_bl(pair)))
        inv_cov.append(_bl_to_lane(invc))

    # ---- U = inv_cov @ H @ V  (all users collapsed into one fused ABC call) ----
    items = [[inv_cov[iu], h[assigned_bs[iu]][iu], v_in[iu]] for iu in range(U)]
    omns_u = [(users_dim[iu], users_dim[iu]) for iu in range(U)]
    u_lane = _run_many(_k_abc, items, omns_u, tbl)

    # ---- W^{-1} = I - herm(U^H H V);  W = herm(inv(W^{-1})) ----
    items = [[_lane_conjT(u_lane[iu]), h[assigned_bs[iu]][iu], v_in[iu]]
             for iu in range(U)]
    q = _run_many(_k_abc, items, omns_u, tbl)
    w_lane = []
    for iu in range(U):
        ud = users_dim[iu]
        qr, qi = _lane_clean_herm(q[iu])
        eye = jnp.eye(ud, dtype=jnp.float32)[:, :, None]
        winv = (eye - qr, -qi)
        w = clean_hermitian(cinv_hermitian(_lane_to_bl(winv)))
        w_lane.append(_bl_to_lane(w))

    # ---- UWU^H per user (one fused AMAH call) ----
    items = [[u_lane[iu], w_lane[iu]] for iu in range(U)]
    uwu = _run_many(_k_amah, items, omns_u, tbl)
    uwu = [_lane_clean_herm(p) for p in uwu]

    # ---- v_tilde = H^H U W * rweight ----
    items = [[hh[assigned_bs[iu]][iu], u_lane[iu], w_lane[iu]] for iu in range(U)]
    omns_vt = [(bss_dim[assigned_bs[iu]], users_dim[iu]) for iu in range(U)]
    vt = _run_many(_k_abc, items, omns_vt, tbl)
    vt = [(vt[iu][0] * rw[iu][None, None, :], vt[iu][1] * rw[iu][None, None, :])
          for iu in range(U)]

    # ---- uplink covariance per BS: sum_u rweight_u * herm(H^H uwu H) ----
    items = [[hh[ib][iu], uwu[iu]] for ib in range(NB) for iu in range(U)]
    omns_ul = [(bss_dim[ib], bss_dim[ib]) for ib in range(NB) for iu in range(U)]
    ul_parts = _run_many(_k_amah, items, omns_ul, tbl)
    ul_cov = []
    for ib in range(NB):
        accr, acci = None, None
        for iu in range(U):
            pr, pi = _lane_clean_herm(ul_parts[ib * U + iu])
            pr = pr * rw[iu][None, None, :]
            pi = pi * rw[iu][None, None, :]
            accr = pr if accr is None else accr + pr
            acci = pi if acci is None else acci + pi
        ul_cov.append((accr, acci))

    # ---- vt_cat and aux = vt_cat vt_cat^H per BS ----
    vt_cat = []
    for ib in range(NB):
        vr = jnp.concatenate([vt[j][0] for j in bss_assign[ib]], axis=1)
        vi = jnp.concatenate([vt[j][1] for j in bss_assign[ib]], axis=1)
        vt_cat.append((vr, vi))
    omns_sq = [(bss_dim[ib], bss_dim[ib]) for ib in range(NB)]
    aux = _run_many(_k_aah, [[vt_cat[ib]] for ib in range(NB)], omns_sq, tbl)

    # ---- eigendecomposition + Lagrangian multiplier + pseudo-inverse per BS ----
    # TODO(synk): eigh has no Pallas equivalent; plain-XLA complex64 eigh used.
    eigres = [jnp.linalg.eigh(_lane_to_bl(ul_cov[ib])) for ib in range(NB)]
    items = [[_bl_to_lane(jnp.conjugate(jnp.swapaxes(eigres[ib][1], -2, -1))), aux[ib]]
             for ib in range(NB)]
    quad = _run_many(_k_amah, items, omns_sq, tbl)

    aug, scaled_l, evec_l = [], [], []
    for ib in range(NB):
        bd = bss_dim[ib]
        eigval = jnp.maximum(eigres[ib][0], 0.0)                     # (Bp, bd)
        eigvec = eigres[ib][1]
        qr = quad[ib][0]
        nom = jnp.stack([qr[d, d, :] for d in range(bd)], axis=0)    # (bd, Bp)
        nom = jnp.maximum(nom, 0.0) / maxpow[ib][None, :]
        lam = jnp.swapaxes(eigval, 0, 1)                             # (bd, Bp)
        mu = rationalfct_solve_0d2(nom, lam, num_iter=lagrangian_max_iter)
        mu = jnp.maximum(mu, MIN_LAGRANGIAN)                         # (Bp,)
        eye = jnp.eye(bd, dtype=jnp.float32)[:, :, None]
        aug.append((ul_cov[ib][0] + eye * mu[None, None, :], ul_cov[ib][1]))
        ev_loaded = eigval + mu[:, None]
        ev_loaded = jnp.where(ev_loaded < PSEUDOINV_SVAL_THRESH, 1e12, ev_loaded)
        scaled = eigvec * (1.0 / ev_loaded)[..., None, :]
        scaled_l.append(_bl_to_lane(scaled))
        evec_l.append(_bl_to_lane(eigvec))
    items = [[scaled_l[ib], evec_l[ib]] for ib in range(NB)]
    inv_aug = _run_many(_k_abh, items, omns_sq, tbl)
    inv_aug = [_lane_clean_herm(p) for p in inv_aug]

    # ---- V update: fused graph filter (ar + ma + diagload, cReLU, recomb) ----
    items = [[inv_aug[ib], aug[ib], vt_cat[ib]] for ib in range(NB)]
    omns_v = [(bss_dim[ib], vt_cat[ib][0].shape[1]) for ib in range(NB)]
    filt = _run_many(_k_vupd, items, omns_v, tbl, smem_scalar=params_packed)
    v_out = [None] * U
    for ib in range(NB):
        off = 0
        fr, fi = filt[ib]
        for j in bss_assign[ib]:
            udj = users_dim[j]
            v_out[j] = (fr[:, off:off + udj, :], fi[:, off:off + udj, :])
            off += udj

    # ---- power correction ----
    corr = []
    for ib in range(NB):
        p = None
        for iu in bss_assign[ib]:
            pw = jnp.sum(v_out[iu][0] ** 2 + v_out[iu][1] ** 2, axis=(0, 1))  # (Bp,)
            p = pw if p is None else p + pw
        cur = jnp.maximum(maxpow[ib], p)
        corr.append(jnp.minimum(jnp.sqrt(maxpow[ib] / cur), 1.0))
    v_out = [(v_out[iu][0] * corr[assigned_bs[iu]][None, None, :],
              v_out[iu][1] * corr[assigned_bs[iu]][None, None, :]) for iu in range(U)]

    # inference mode: no running-mean updates, no bad-sample detection, no bypass
    return v_out, u_lane, w_lane


# ----------------------------------------------------------------------------
# GCNWMMSE.forward (shared parameters across layers)
# ----------------------------------------------------------------------------
def gcnwmmse_forward(scenario, params, num_layers=3, lagrangian_max_iter=8):
    U = scenario['num_users']
    NB = scenario['num_bss']
    assigned_bs = scenario['users_assign']
    batch = tuple(scenario['bss_pow'].shape[:-1])
    B = _flat(batch)
    tbl = _pick_tbl(B)
    params_packed = _pack_filter_params(params)

    # lane-layout constants (converted once; reused by all layers; padded lanes are
    # filled so XLA inv/eigh on them stays finite: noise/maxpow padded with 1).
    h = [[_to_lane(scenario['channels'][ib][iu], batch, tbl) for iu in range(U)]
         for ib in range(NB)]
    hh = [[_lane_conjT(h[ib][iu]) for iu in range(U)] for ib in range(NB)]
    noise = [_to_lane_vec(scenario['users_noise_pow'][..., iu], batch, tbl, 1.0)
             for iu in range(U)]
    rw = [_to_lane_vec(scenario['rate_weights'][..., iu], batch, tbl, 0.0)
          for iu in range(U)]
    maxpow = [_to_lane_vec(scenario['bss_pow'][..., ib], batch, tbl, 1.0)
              for ib in range(NB)]
    lanes = dict(h=h, hh=hh, noise=noise, rw=rw, maxpow=maxpow)
    cfg = dict(num_users=U, num_bss=NB, users_dim=scenario['users_dim'],
               bss_dim=scenario['bss_dim'], users_assign=assigned_bs,
               bss_assign=scenario['bss_assign'])

    v0 = downlink_mrc(scenario)
    v = [_to_lane(v0[iu], batch, tbl) for iu in range(U)]
    v_layers = [[_from_lane(v[iu], batch) for iu in range(U)]]
    u_layers, w_layers = [], []
    for _ in range(num_layers):
        v, u, w = gcnwmmse_layer_lane(cfg, lanes, params_packed, v, tbl,
                                      lagrangian_max_iter=lagrangian_max_iter)
        v_layers.append([_from_lane(v[iu], batch) for iu in range(U)])
        u_layers.append([_from_lane(u[iu], batch) for iu in range(U)])
        w_layers.append([_from_lane(w[iu], batch) for iu in range(U)])

    v_out = [jnp.stack([vl[i] for vl in v_layers], 0) for i in range(U)]
    u_out = [jnp.stack([ul[i] for ul in u_layers], 0) for i in range(U)]
    w_out = [jnp.stack([wl[i] for wl in w_layers], 0) for i in range(U)]
    bss_pow = jnp.zeros((num_layers + 1,) + scenario['bss_pow'].shape, jnp.float32)
    for iu in range(U):
        bss_pow = bss_pow.at[..., assigned_bs[iu]].add(bf_mat_pow(v_out[iu]))
    return v_out, u_out, w_out, bss_pow


# ----------------------------------------------------------------------------
# deterministic parameter init (GCNWMMSELayer.__init__ shapes, default config)
# ----------------------------------------------------------------------------
def init_params(key, v_num_channels=4):
    ks = jax.random.split(key, 5)
    s = 1.0 / np.sqrt(v_num_channels + 1.0)
    return {
        'v_param_ar':       randcn(ks[0], (1, v_num_channels)) * s,
        'v_param_ma':       randcn(ks[1], (1, v_num_channels)) * s,
        'v_param_diagload': randcn(ks[2], (1, v_num_channels)) * s,
        'v_param_recomb':   randcn(ks[3], (v_num_channels, 1)) * s,
        # defined in __init__, unused when v_bypass_param is None:
        'v_bypass_mat':     randcn(ks[4], (v_num_channels, v_num_channels))
                            / np.sqrt(2.0 * v_num_channels),
    }


def _vupdate_ref(inv_aug, aug, vt, params):
    """Plain-XLA reference of the fused V-update kernel (checking only)."""
    vt_t = jnp.swapaxes(vt[None, ...], 0, -1)                  # (S, *batch, bd, 1)
    t = (jnp.matmul(inv_aug, vt_t) @ params['v_param_ar']
         + jnp.matmul(aug, vt_t) @ params['v_param_ma']
         + vt_t @ params['v_param_diagload'])
    t = complex_relu(t) @ params['v_param_recomb']
    return jnp.swapaxes(t, 0, -1)[0]


# ----------------------------------------------------------------------------
if __name__ == "__main__":
    key = jax.random.PRNGKey(0)
    kc, kp, *kchk = jax.random.split(key, 12)

    params = init_params(kp, v_num_channels=4)

    # ---- kernel sanity checks: Pallas kernels vs plain-XLA complex algebra ----
    def chk(x, y, tol=2e-4):
        np.testing.assert_allclose(np.asarray(x), np.asarray(y), rtol=tol, atol=tol)

    a = randcn(kchk[0], (3, 5, 7))
    b = randcn(kchk[1], (3, 7, 6))
    c = randcn(kchk[2], (3, 6, 4))
    m5 = randcn(kchk[3], (3, 5, 5))
    m7 = randcn(kchk[4], (3, 7, 7))
    b2 = randcn(kchk[5], (3, 6, 7))
    chk(cmm(a, b), a @ b)
    chk(cmm(a, b[0]), a @ b[0])                        # shared (unbatched) RHS path
    chk(cmm3(a, b, c), a @ b @ c)
    chk(cmat_square(a), a @ conjT(a))
    chk(cmm_absq(a, b), (a @ b) @ conjT(a @ b))
    chk(cmm_amah(a, m7), a @ m7 @ conjT(a))
    chk(cmm_ahma(a, m5), conjT(a) @ m5 @ a)
    chk(cmm_abh(a, b2), a @ conjT(b2))
    pp = _pack_filter_params(params)
    inv_aug_t = randcn(kchk[6], (3, 8, 8))
    aug_t = randcn(kchk[7], (3, 8, 8))
    vt_t = randcn(kchk[8], (3, 8, 5))
    chk(graph_filter_v_update(inv_aug_t, aug_t, vt_t, pp),
        _vupdate_ref(inv_aug_t, aug_t, vt_t, params))

    # ---- small scenario: 2 BSs x 8 antennas, 4 users x 2 antennas, batch = 2 ----
    batch, num_bss, num_users = 2, 2, 4
    bss_dim = [8, 8]
    users_dim = [2, 2, 2, 2]
    users_assign = [0, 0, 1, 1]
    bss_assign = [[0, 1], [2, 3]]

    ch_keys = jax.random.split(kc, num_bss * num_users)
    channels, idx = [], 0
    for ib in range(num_bss):
        row = []
        for iu in range(num_users):
            row.append(randcn(ch_keys[idx], (batch, users_dim[iu], bss_dim[ib])))
            idx += 1
        channels.append(row)

    bss_pow_in = jnp.full((batch, num_bss), 10.0, jnp.float32)
    users_noise_pow = jnp.ones((batch, num_users), jnp.float32)
    rate_weights = jnp.ones((batch, num_users), jnp.float32)

    static_cfg = dict(num_users=num_users, num_bss=num_bss,
                      users_assign=users_assign, bss_assign=bss_assign,
                      bss_dim=bss_dim, users_dim=users_dim)

    # Whole forward under one jit: all pad/split/eigh/inv glue fused, kernel launches
    # queued without host round-trips (review item).
    @jax.jit
    def forward_fn(channels, bss_pow, users_noise_pow, rate_weights, params):
        scn = dict(static_cfg)
        scn.update(channels=channels, bss_pow=bss_pow,
                   users_noise_pow=users_noise_pow, rate_weights=rate_weights)
        return gcnwmmse_forward(scn, params, num_layers=3, lagrangian_max_iter=8)

    v_out, u_out, w_out, bss_pow_out = forward_fn(
        channels, bss_pow_in, users_noise_pow, rate_weights, params)
    jax.block_until_ready((v_out, u_out, w_out, bss_pow_out))

    assert all(bool(jnp.all(jnp.isfinite(jnp.abs(v)))) for v in v_out)
    assert all(bool(jnp.all(jnp.isfinite(jnp.abs(u)))) for u in u_out)
    assert all(bool(jnp.all(jnp.isfinite(jnp.abs(w)))) for w in w_out)
    assert bool(jnp.all(jnp.isfinite(bss_pow_out)))
    print("KERNEL_OK")
</pallas_src>

<mosaic_0001>
module attributes {stable_mosaic.version = 11 : i64} {
  func.func @_k_ab(%arg0: i32, %arg1: memref<5x7x128xf32, #tpu.memory_space<vmem>>, %arg2: memref<5x7x128xf32, #tpu.memory_space<vmem>>, %arg3: memref<7x6x128xf32, #tpu.memory_space<vmem>>, %arg4: memref<7x6x128xf32, #tpu.memory_space<vmem>>, %arg5: memref<5x6x128xf32, #tpu.memory_space<vmem>>, %arg6: memref<5x6x128xf32, #tpu.memory_space<vmem>>) attributes {dimension_semantics = [#tpu.dimension_semantics<parallel>], iteration_bounds = array<i64: 1>, scalar_prefetch = 0 : i64, scratch_operands = 0 : i64, tpu.core_type = #tpu.core_type<tc>, window_params = [{transform_indices = @transform_0, window_bounds = array<i64: 5, 7, 128>}, {transform_indices = @transform_1, window_bounds = array<i64: 5, 7, 128>}, {transform_indices = @transform_2, window_bounds = array<i64: 7, 6, 128>}, {transform_indices = @transform_3, window_bounds = array<i64: 7, 6, 128>}, {transform_indices = @transform_4, window_bounds = array<i64: 5, 6, 128>}, {transform_indices = @transform_5, window_bounds = array<i64: 5, 6, 128>}]} {
    %c0 = arith.constant 0 : index
    %c0_0 = arith.constant 0 : index
    %c0_1 = arith.constant 0 : index
    %0 = vector.load %arg1[%c0, %c0_0, %c0_1] : memref<5x7x128xf32, #tpu.memory_space<vmem>>, vector<5x7x128xf32>
    %c0_2 = arith.constant 0 : index
    %c0_3 = arith.constant 0 : index
    %c0_4 = arith.constant 0 : index
    %1 = vector.load %arg2[%c0_2, %c0_3, %c0_4] : memref<5x7x128xf32, #tpu.memory_space<vmem>>, vector<5x7x128xf32>
    %c0_5 = arith.constant 0 : index
    %c0_6 = arith.constant 0 : index
    %c0_7 = arith.constant 0 : index
    %2 = vector.load %arg3[%c0_5, %c0_6, %c0_7] : memref<7x6x128xf32, #tpu.memory_space<vmem>>, vector<7x6x128xf32>
    %c0_8 = arith.constant 0 : index
    %c0_9 = arith.constant 0 : index
    %c0_10 = arith.constant 0 : index
    %3 = vector.load %arg4[%c0_8, %c0_9, %c0_10] : memref<7x6x128xf32, #tpu.memory_space<vmem>>, vector<7x6x128xf32>
    %cst = arith.constant 0.000000e+00 : f32
    %4 = vector.broadcast %cst : f32 to vector<5x6x128xf32>
    %cst_11 = arith.constant 0.000000e+00 : f32
    %5 = vector.broadcast %cst_11 : f32 to vector<5x6x128xf32>
    %6 = vector.extract_strided_slice %0 {offsets = [0, 0, 0], sizes = [5, 1, 128], strides = [1, 1, 1]} : vector<5x7x128xf32> to vector<5x1x128xf32>
    %7 = vector.extract_strided_slice %1 {offsets = [0, 0, 0], sizes = [5, 1, 128], strides = [1, 1, 1]} : vector<5x7x128xf32> to vector<5x1x128xf32>
    %8 = vector.extract_strided_slice %2 {offsets = [0, 0, 0], sizes = [1, 6, 128], strides = [1, 1, 1]} : vector<7x6x128xf32> to vector<1x6x128xf32>
    %9 = vector.extract_strided_slice %3 {offsets = [0, 0, 0], sizes = [1, 6, 128], strides = [1, 1, 1]} : vector<7x6x128xf32> to vector<1x6x128xf32>
    %10 = vector.broadcast %6 : vector<5x1x128xf32> to vector<5x6x128xf32>
    %11 = vector.broadcast %8 : vector<1x6x128xf32> to vector<5x6x128xf32>
    %12 = arith.mulf %10, %11 : vector<5x6x128xf32>
    %13 = arith.addf %4, %12 : vector<5x6x128xf32>
    %14 = vector.broadcast %7 : vector<5x1x128xf32> to vector<5x6x128xf32>
    %15 = vector.broadcast %9 : vector<1x6x128xf32> to vector<5x6x128xf32>
    %16 = arith.mulf %14, %15 : vector<5x6x128xf32>
    %17 = arith.subf %13, %16 : vector<5x6x128xf32>
    %18 = vector.broadcast %6 : vector<5x1x128xf32> to vector<5x6x128xf32>
    %19 = vector.broadcast %9 : vector<1x6x128xf32> to vector<5x6x128xf32>
    %20 = arith.mulf %18, %19 : vector<5x6x128xf32>
    %21 = arith.addf %5, %20 : vector<5x6x128xf32>
    %22 = vector.broadcast %7 : vector<5x1x128xf32> to vector<5x6x128xf32>
    %23 = vector.broadcast %8 : vector<1x6x128xf32> to vector<5x6x128xf32>
    %24 = arith.mulf %22, %23 : vector<5x6x128xf32>
    %25 = arith.addf %21, %24 : vector<5x6x128xf32>
    %26 = vector.extract_strided_slice %0 {offsets = [0, 1, 0], sizes = [5, 1, 128], strides = [1, 1, 1]} : vector<5x7x128xf32> to vector<5x1x128xf32>
    %27 = vector.extract_strided_slice %1 {offsets = [0, 1, 0], sizes = [5, 1, 128], strides = [1, 1, 1]} : vector<5x7x128xf32> to vector<5x1x128xf32>
    %28 = vector.extract_strided_slice %2 {offsets = [1, 0, 0], sizes = [1, 6, 128], strides = [1, 1, 1]} : vector<7x6x128xf32> to vector<1x6x128xf32>
    %29 = vector.extract_strided_slice %3 {offsets = [1, 0, 0], sizes = [1, 6, 128], strides = [1, 1, 1]} : vector<7x6x128xf32> to vector<1x6x128xf32>
    %30 = vector.broadcast %26 : vector<5x1x128xf32> to vector<5x6x128xf32>
    %31 = vector.broadcast %28 : vector<1x6x128xf32> to vector<5x6x128xf32>
    %32 = arith.mulf %30, %31 : vector<5x6x128xf32>
    %33 = arith.addf %17, %32 : vector<5x6x128xf32>
    %34 = vector.broadcast %27 : vector<5x1x128xf32> to vector<5x6x128xf32>
    %35 = vector.broadcast %29 : vector<1x6x128xf32> to vector<5x6x128xf32>
    %36 = arith.mulf %34, %35 : vector<5x6x128xf32>
    %37 = arith.subf %33, %36 : vector<5x6x128xf32>
    %38 = vector.broadcast %26 : vector<5x1x128xf32> to vector<5x6x128xf32>
    %39 = vector.broadcast %29 : vector<1x6x128xf32> to vector<5x6x128xf32>
    %40 = arith.mulf %38, %39 : vector<5x6x128xf32>
    %41 = arith.addf %25, %40 : vector<5x6x128xf32>
    %42 = vector.broadcast %27 : vector<5x1x128xf32> to vector<5x6x128xf32>
    %43 = vector.broadcast %28 : vector<1x6x128xf32> to vector<5x6x128xf32>
    %44 = arith.mulf %42, %43 : vector<5x6x128xf32>
    %45 = arith.addf %41, %44 : vector<5x6x128xf32>
    %46 = vector.extract_strided_slice %0 {offsets = [0, 2, 0], sizes = [5, 1, 128], strides = [1, 1, 1]} : vector<5x7x128xf32> to vector<5x1x128xf32>
    %47 = vector.extract_strided_slice %1 {offsets = [0, 2, 0], sizes = [5, 1, 128], strides = [1, 1, 1]} : vector<5x7x128xf32> to vector<5x1x128xf32>
    %48 = vector.extract_strided_slice %2 {offsets = [2, 0, 0], sizes = [1, 6, 128], strides = [1, 1, 1]} : vector<7x6x128xf32> to vector<1x6x128xf32>
    %49 = vector.extract_strided_slice %3 {offsets = [2, 0, 0], sizes = [1, 6, 128], strides = [1, 1, 1]} : vector<7x6x128xf32> to vector<1x6x128xf32>
    %50 = vector.broadcast %46 : vector<5x1x128xf32> to vector<5x6x128xf32>
    %51 = vector.broadcast %48 : vector<1x6x128xf32> to vector<5x6x128xf32>
    %52 = arith.mulf %50, %51 : vector<5x6x128xf32>
    %53 = arith.addf %37, %52 : vector<5x6x128xf32>
    %54 = vector.broadcast %47 : vector<5x1x128xf32> to vector<5x6x128xf32>
    %55 = vector.broadcast %49 : vector<1x6x128xf32> to vector<5x6x128xf32>
    %56 = arith.mulf %54, %55 : vector<5x6x128xf32>
    %57 = arith.subf %53, %56 : vector<5x6x128xf32>
    %58 = vector.broadcast %46 : vector<5x1x128xf32> to vector<5x6x128xf32>
    %59 = vector.broadcast %49 : vector<1x6x128xf32> to vector<5x6x128xf32>
    %60 = arith.mulf %58, %59 : vector<5x6x128xf32>
    %61 = arith.addf %45, %60 : vector<5x6x128xf32>
    %62 = vector.broadcast %47 : vector<5x1x128xf32> to vector<5x6x128xf32>
    %63 = vector.broadcast %48 : vector<1x6x128xf32> to vector<5x6x128xf32>
    %64 = arith.mulf %62, %63 : vector<5x6x128xf32>
    %65 = arith.addf %61, %64 : vector<5x6x128xf32>
    %66 = vector.extract_strided_slice %0 {offsets = [0, 3, 0], sizes = [5, 1, 128], strides = [1, 1, 1]} : vector<5x7x128xf32> to vector<5x1x128xf32>
    %67 = vector.extract_strided_slice %1 {offsets = [0, 3, 0], sizes = [5, 1, 128], strides = [1, 1, 1]} : vector<5x7x128xf32> to vector<5x1x128xf32>
    %68 = vector.extract_strided_slice %2 {offsets = [3, 0, 0], sizes = [1, 6, 128], strides = [1, 1, 1]} : vector<7x6x128xf32> to vector<1x6x128xf32>
    %69 = vector.extract_strided_slice %3 {offsets = [3, 0, 0], sizes = [1, 6, 128], strides = [1, 1, 1]} : vector<7x6x128xf32> to vector<1x6x128xf32>
    %70 = vector.broadcast %66 : vector<5x1x128xf32> to vector<5x6x128xf32>
    %71 = vector.broadcast %68 : vector<1x6x128xf32> to vector<5x6x128xf32>
    %72 = arith.mulf %70, %71 : vector<5x6x128xf32>
    %73 = arith.addf %57, %72 : vector<5x6x128xf32>
    %74 = vector.broadcast %67 : vector<5x1x128xf32> to vector<5x6x128xf32>
    %75 = vector.broadcast %69 : vector<1x6x128xf32> to vector<5x6x128xf32>
    %76 = arith.mulf %74, %75 : vector<5x6x128xf32>
    %77 = arith.subf %73, %76 : vector<5x6x128xf32>
    %78 = vector.broadcast %66 : vector<5x1x128xf32> to vector<5x6x128xf32>
    %79 = vector.broadcast %69 : vector<1x6x128xf32> to vector<5x6x128xf32>
    %80 = arith.mulf %78, %79 : vector<5x6x128xf32>
    %81 = arith.addf %65, %80 : vector<5x6x128xf32>
    %82 = vector.broadcast %67 : vector<5x1x128xf32> to vector<5x6x128xf32>
    %83 = vector.broadcast %68 : vector<1x6x128xf32> to vector<5x6x128xf32>
    %84 = arith.mulf %82, %83 : vector<5x6x128xf32>
    %85 = arith.addf %81, %84 : vector<5x6x128xf32>
    %86 = vector.extract_strided_slice %0 {offsets = [0, 4, 0], sizes = [5, 1, 128], strides = [1, 1, 1]} : vector<5x7x128xf32> to vector<5x1x128xf32>
    %87 = vector.extract_strided_slice %1 {offsets = [0, 4, 0], sizes = [5, 1, 128], strides = [1, 1, 1]} : vector<5x7x128xf32> to vector<5x1x128xf32>
    %88 = vector.extract_strided_slice %2 {offsets = [4, 0, 0], sizes = [1, 6, 128], strides = [1, 1, 1]} : vector<7x6x128xf32> to vector<1x6x128xf32>
    %89 = vector.extract_strided_slice %3 {offsets = [4, 0, 0], sizes = [1, 6, 128], strides = [1, 1, 1]} : vector<7x6x128xf32> to vector<1x6x128xf32>
    %90 = vector.broadcast %86 : vector<5x1x128xf32> to vector<5x6x128xf32>
    %91 = vector.broadcast %88 : vector<1x6x128xf32> to vector<5x6x128xf32>
    %92 = arith.mulf %90, %91 : vector<5x6x128xf32>
    %93 = arith.addf %77, %92 : vector<5x6x128xf32>
    %94 = vector.broadcast %87 : vector<5x1x128xf32> to vector<5x6x128xf32>
    %95 = vector.broadcast %89 : vector<1x6x128xf32> to vector<5x6x128xf32>
    %96 = arith.mulf %94, %95 : vector<5x6x128xf32>
    %97 = arith.subf %93, %96 : vector<5x6x128xf32>
    %98 = vector.broadcast %86 : vector<5x1x128xf32> to vector<5x6x128xf32>
    %99 = vector.broadcast %89 : vector<1x6x128xf32> to vector<5x6x128xf32>
    %100 = arith.mulf %98, %99 : vector<5x6x128xf32>
    %101 = arith.addf %85, %100 : vector<5x6x128xf32>
    %102 = vector.broadcast %87 : vector<5x1x128xf32> to vector<5x6x128xf32>
    %103 = vector.broadcast %88 : vector<1x6x128xf32> to vector<5x6x128xf32>
    %104 = arith.mulf %102, %103 : vector<5x6x128xf32>
    %105 = arith.addf %101, %104 : vector<5x6x128xf32>
    %106 = vector.extract_strided_slice %0 {offsets = [0, 5, 0], sizes = [5, 1, 128], strides = [1, 1, 1]} : vector<5x7x128xf32> to vector<5x1x128xf32>
    %107 = vector.extract_strided_slice %1 {offsets = [0, 5, 0], sizes = [5, 1, 128], strides = [1, 1, 1]} : vector<5x7x128xf32> to vector<5x1x128xf32>
    %108 = vector.extract_strided_slice %2 {offsets = [5, 0, 0], sizes = [1, 6, 128], strides = [1, 1, 1]} : vector<7x6x128xf32> to vector<1x6x128xf32>
    %109 = vector.extract_strided_slice %3 {offsets = [5, 0, 0], sizes = [1, 6, 128], strides = [1, 1, 1]} : vector<7x6x128xf32> to vector<1x6x128xf32>
    %110 = vector.broadcast %106 : vector<5x1x128xf32> to vector<5x6x128xf32>
    %111 = vector.broadcast %108 : vector<1x6x128xf32> to vector<5x6x128xf32>
    %112 = arith.mulf %110, %111 : vector<5x6x128xf32>
    %113 = arith.addf %97, %112 : vector<5x6x128xf32>
    %114 = vector.broadcast %107 : vector<5x1x128xf32> to vector<5x6x128xf32>
    %115 = vector.broadcast %109 : vector<1x6x128xf32> to vector<5x6x128xf32>
    %116 = arith.mulf %114, %115 : vector<5x6x128xf32>
    %117 = arith.subf %113, %116 : vector<5x6x128xf32>
    %118 = vector.broadcast %106 : vector<5x1x128xf32> to vector<5x6x128xf32>
    %119 = vector.broadcast %109 : vector<1x6x128xf32> to vector<5x6x128xf32>
    %120 = arith.mulf %118, %119 : vector<5x6x128xf32>
    %121 = arith.addf %105, %120 : vector<5x6x128xf32>
    %122 = vector.broadcast %107 : vector<5x1x128xf32> to vector<5x6x128xf32>
    %123 = vector.broadcast %108 : vector<1x6x128xf32> to vector<5x6x128xf32>
    %124 = arith.mulf %122, %123 : vector<5x6x128xf32>
    %125 = arith.addf %121, %124 : vector<5x6x128xf32>
    %126 = vector.extract_strided_slice %0 {offsets = [0, 6, 0], sizes = [5, 1, 128], strides = [1, 1, 1]} : vector<5x7x128xf32> to vector<5x1x128xf32>
    %127 = vector.extract_strided_slice %1 {offsets = [0, 6, 0], sizes = [5, 1, 128], strides = [1, 1, 1]} : vector<5x7x128xf32> to vector<5x1x128xf32>
    %128 = vector.extract_strided_slice %2 {offsets = [6, 0, 0], sizes = [1, 6, 128], strides = [1, 1, 1]} : vector<7x6x128xf32> to vector<1x6x128xf32>
    %129 = vector.extract_strided_slice %3 {offsets = [6, 0, 0], sizes = [1, 6, 128], strides = [1, 1, 1]} : vector<7x6x128xf32> to vector<1x6x128xf32>
    %130 = vector.broadcast %126 : vector<5x1x128xf32> to vector<5x6x128xf32>
    %131 = vector.broadcast %128 : vector<1x6x128xf32> to vector<5x6x128xf32>
    %132 = arith.mulf %130, %131 : vector<5x6x128xf32>
    %133 = arith.addf %117, %132 : vector<5x6x128xf32>
    %134 = vector.broadcast %127 : vector<5x1x128xf32> to vector<5x6x128xf32>
    %135 = vector.broadcast %129 : vector<1x6x128xf32> to vector<5x6x128xf32>
    %136 = arith.mulf %134, %135 : vector<5x6x128xf32>
    %137 = arith.subf %133, %136 : vector<5x6x128xf32>
    %138 = vector.broadcast %126 : vector<5x1x128xf32> to vector<5x6x128xf32>
    %139 = vector.broadcast %129 : vector<1x6x128xf32> to vector<5x6x128xf32>
    %140 = arith.mulf %138, %139 : vector<5x6x128xf32>
    %141 = arith.addf %125, %140 : vector<5x6x128xf32>
    %142 = vector.broadcast %127 : vector<5x1x128xf32> to vector<5x6x128xf32>
    %143 = vector.broadcast %128 : vector<1x6x128xf32> to vector<5x6x128xf32>
    %144 = arith.mulf %142, %143 : vector<5x6x128xf32>
    %145 = arith.addf %141, %144 : vector<5x6x128xf32>
    %c0_12 = arith.constant 0 : index
    %c0_13 = arith.constant 0 : index
    %c0_14 = arith.constant 0 : index
    %146 = vector.load %arg5[%c0_12, %c0_13, %c0_14] : memref<5x6x128xf32, #tpu.memory_space<vmem>>, vector<5x6x128xf32>
    tpu.vector_store %arg5[%c0_12, %c0_13, %c0_14], %137 {strides = array<i32>} : memref<5x6x128xf32, #tpu.memory_space<vmem>>, vector<5x6x128xf32>,
    %c0_15 = arith.constant 0 : index
    %c0_16 = arith.constant 0 : index
    %c0_17 = arith.constant 0 : index
    %147 = vector.load %arg6[%c0_15, %c0_16, %c0_17] : memref<5x6x128xf32, #tpu.memory_space<vmem>>, vector<5x6x128xf32>
    tpu.vector_store %arg6[%c0_15, %c0_16, %c0_17], %145 {strides = array<i32>} : memref<5x6x128xf32, #tpu.memory_space<vmem>>, vector<5x6x128xf32>,
    return
  }
  func.func @transform_0(%arg0: i32) -> (i32, i32, i32) {
    %c0_i32 = arith.constant 0 : i32
    %c0_i32_0 = arith.constant 0 : i32
    %c0_i32_1 = arith.constant 0 : i32
    return %c0_i32, %c0_i32_0, %arg0 : i32, i32, i32
  }
  func.func @transform_1(%arg0: i32) -> (i32, i32, i32) {
    %c0_i32 = arith.constant 0 : i32
    %c0_i32_0 = arith.constant 0 : i32
    %c0_i32_1 = arith.constant 0 : i32
    return %c0_i32, %c0_i32_0, %arg0 : i32, i32, i32
  }
  func.func @transform_2(%arg0: i32) -> (i32, i32, i32) {
    %c0_i32 = arith.constant 0 : i32
    %c0_i32_0 = arith.constant 0 : i32
    %c0_i32_1 = arith.constant 0 : i32
    return %c0_i32, %c0_i32_0, %arg0 : i32, i32, i32
  }
  func.func @transform_3(%arg0: i32) -> (i32, i32, i32) {
    %c0_i32 = arith.constant 0 : i32
    %c0_i32_0 = arith.constant 0 : i32
    %c0_i32_1 = arith.constant 0 : i32
    return %c0_i32, %c0_i32_0, %arg0 : i32, i32, i32
  }
  func.func @transform_4(%arg0: i32) -> (i32, i32, i32) {
    %c0_i32 = arith.constant 0 : i32
    %c0_i32_0 = arith.constant 0 : i32
    %c0_i32_1 = arith.constant 0 : i32
    return %c0_i32, %c0_i32_0, %arg0 : i32, i32, i32
  }
  func.func @transform_5(%arg0: i32) -> (i32, i32, i32) {
    %c0_i32 = arith.constant 0 : i32
    %c0_i32_0 = arith.constant 0 : i32
    %c0_i32_1 = arith.constant 0 : i32
    return %c0_i32, %c0_i32_0, %arg0 : i32, i32, i32
  }
}

</mosaic_0001>

<llo_original>
// kernel: custom-call.3
$region0: #{custom-call.3}
  %s0 = inlined_call_operand.vmem [shape: c64[3,7,6], index: 0, kind: input, shape index: {}]
  %s1 = inlined_call_operand.vmem [shape: f32[3,7,6], index: 1, kind: output, shape index: {}]
  %s2 = scalar_lea.vmem %s0, 56
  %v3 = vld [vmem:[%s2] sm:$0xff]
  %4 = vst [vmem:[%s1] sm:$0xff] %v3
  %s5 = scalar_lea.vmem %s1, 8
  %s6 = scalar_lea.vmem %s2, 8
  %v7 = vld [vmem:[%s6] sm:$0xff]
  %8 = vst [vmem:[%s5] sm:$0xff] %v7
  %s9 = scalar_lea.vmem %s1, 16
  %s10 = scalar_lea.vmem %s2, 16
  %v11 = vld [vmem:[%s10] sm:$0xff]
  %12 = vst [vmem:[%s9] sm:$0xff] %v11
  %s13 = scalar_lea.vmem %s1, 24
  %s14 = scalar_lea.vmem %s2, 24
  %v15 = vld [vmem:[%s14] sm:$0xff]
  %16 = vst [vmem:[%s13] sm:$0xff] %v15
  %s17 = scalar_lea.vmem %s1, 32
  %s18 = scalar_lea.vmem %s2, 32
  %v19 = vld [vmem:[%s18] sm:$0xff]
  %20 = vst [vmem:[%s17] sm:$0xff] %v19
  %s21 = scalar_lea.vmem %s1, 40
  %s22 = scalar_lea.vmem %s2, 40
  %v23 = vld [vmem:[%s22] sm:$0xff]
  %24 = vst [vmem:[%s21] sm:$0xff] %v23
  %s25 = scalar_lea.vmem %s1, 48
  %s26 = scalar_lea.vmem %s2, 48
  %v27 = vld [vmem:[%s26] sm:$0xff]
  %28 = vst [vmem:[%s25] sm:$0xff] %v27

// kernel: custom-call.2
$region0: #{custom-call.2}
  %s0 = inlined_call_operand.vmem [shape: c64[3,7,6], index: 0, kind: input, shape index: {}]
  %s1 = inlined_call_operand.vmem [shape: f32[3,7,6], index: 1, kind: output, shape index: {}]
  %v2 = vld [vmem:[%s0] sm:$0xff]
  %3 = vst [vmem:[%s1] sm:$0xff] %v2
  %s4 = scalar_lea.vmem %s1, 8
  %s5 = scalar_lea.vmem %s0, 8
  %v6 = vld [vmem:[%s5] sm:$0xff]
  %7 = vst [vmem:[%s4] sm:$0xff] %v6
  %s8 = scalar_lea.vmem %s1, 16
  %s9 = scalar_lea.vmem %s0, 16
  %v10 = vld [vmem:[%s9] sm:$0xff]
  %11 = vst [vmem:[%s8] sm:$0xff] %v10
  %s12 = scalar_lea.vmem %s1, 24
  %s13 = scalar_lea.vmem %s0, 24
  %v14 = vld [vmem:[%s13] sm:$0xff]
  %15 = vst [vmem:[%s12] sm:$0xff] %v14
  %s16 = scalar_lea.vmem %s1, 32
  %s17 = scalar_lea.vmem %s0, 32
  %v18 = vld [vmem:[%s17] sm:$0xff]
  %19 = vst [vmem:[%s16] sm:$0xff] %v18
  %s20 = scalar_lea.vmem %s1, 40
  %s21 = scalar_lea.vmem %s0, 40
  %v22 = vld [vmem:[%s21] sm:$0xff]
  %23 = vst [vmem:[%s20] sm:$0xff] %v22
  %s24 = scalar_lea.vmem %s1, 48
  %s25 = scalar_lea.vmem %s0, 48
  %v26 = vld [vmem:[%s25] sm:$0xff]
  %27 = vst [vmem:[%s24] sm:$0xff] %v26

// kernel: custom-call
$region0: #{custom-call}
  %s0 = inlined_call_operand.vmem [shape: c64[3,5,7], index: 0, kind: input, shape index: {}]
  %s1 = inlined_call_operand.vmem [shape: f32[3,5,7], index: 1, kind: output, shape index: {}]
  %v2 = vld [vmem:[%s0] sm:$0xff]
  %3 = vst [vmem:[%s1] sm:$0xff] %v2
  %s4 = scalar_lea.vmem %s1, 8
  %s5 = scalar_lea.vmem %s0, 8
  %v6 = vld [vmem:[%s5] sm:$0xff]
  %7 = vst [vmem:[%s4] sm:$0xff] %v6
  %s8 = scalar_lea.vmem %s1, 16
  %s9 = scalar_lea.vmem %s0, 16
  %v10 = vld [vmem:[%s9] sm:$0xff]
  %11 = vst [vmem:[%s8] sm:$0xff] %v10
  %s12 = scalar_lea.vmem %s1, 24
  %s13 = scalar_lea.vmem %s0, 24
  %v14 = vld [vmem:[%s13] sm:$0xff]
  %15 = vst [vmem:[%s12] sm:$0xff] %v14
  %s16 = scalar_lea.vmem %s1, 32
  %s17 = scalar_lea.vmem %s0, 32
  %v18 = vld [vmem:[%s17] sm:$0xff]
  %19 = vst [vmem:[%s16] sm:$0xff] %v18

// kernel: custom-call.1
$region0: #{custom-call.1}
  %s0 = inlined_call_operand.vmem [shape: c64[3,5,7], index: 0, kind: input, shape index: {}]
  %s1 = inlined_call_operand.vmem [shape: f32[3,5,7], index: 1, kind: output, shape index: {}]
  %s2 = scalar_lea.vmem %s0, 40
  %v3 = vld [vmem:[%s2] sm:$0xff]
  %4 = vst [vmem:[%s1] sm:$0xff] %v3
  %s5 = scalar_lea.vmem %s1, 8
  %s6 = scalar_lea.vmem %s2, 8
  %v7 = vld [vmem:[%s6] sm:$0xff]
  %8 = vst [vmem:[%s5] sm:$0xff] %v7
  %s9 = scalar_lea.vmem %s1, 16
  %s10 = scalar_lea.vmem %s2, 16
  %v11 = vld [vmem:[%s10] sm:$0xff]
  %12 = vst [vmem:[%s9] sm:$0xff] %v11
  %s13 = scalar_lea.vmem %s1, 24
  %s14 = scalar_lea.vmem %s2, 24
  %v15 = vld [vmem:[%s14] sm:$0xff]
  %16 = vst [vmem:[%s13] sm:$0xff] %v15
  %s17 = scalar_lea.vmem %s1, 32
  %s18 = scalar_lea.vmem %s2, 32
  %v19 = vld [vmem:[%s18] sm:$0xff]
  %20 = vst [vmem:[%s17] sm:$0xff] %v19

// kernel: custom-call.4
$region0: #{custom-call.4}
  %s0 = inlined_call_operand.vmem [shape: f32[3,5,6], index: 0, kind: input, shape index: {}]
  %s1 = inlined_call_operand.vmem [shape: f32[3,5,6], index: 1, kind: input, shape index: {}]
  %s2 = inlined_call_operand.vmem [shape: c64[3,5,6], index: 2, kind: output, shape index: {}]
  %s3 = scalar_lea.vmem %s2, 40
  %v4 = vld [vmem:[%s0] sm:$0xff]
  %5 = vst [vmem:[%s2] sm:$0xff] %v4
  %s6 = scalar_lea.vmem %s2, 8
  %s7 = scalar_lea.vmem %s0, 8
  %v8 = vld [vmem:[%s7] sm:$0xff]
  %9 = vst [vmem:[%s6] sm:$0xff] %v8
  %s10 = scalar_lea.vmem %s2, 16
  %s11 = scalar_lea.vmem %s0, 16
  %v12 = vld [vmem:[%s11] sm:$0xff]
  %13 = vst [vmem:[%s10] sm:$0xff] %v12
  %s14 = scalar_lea.vmem %s2, 24
  %s15 = scalar_lea.vmem %s0, 24
  %v16 = vld [vmem:[%s15] sm:$0xff]
  %17 = vst [vmem:[%s14] sm:$0xff] %v16
  %s18 = scalar_lea.vmem %s2, 32
  %s19 = scalar_lea.vmem %s0, 32
  %v20 = vld [vmem:[%s19] sm:$0xff]
  %21 = vst [vmem:[%s18] sm:$0xff] %v20
  %v22 = vld [vmem:[%s1] sm:$0xff]
  %23 = vst [vmem:[%s3] sm:$0xff] %v22
  %s24 = scalar_lea.vmem %s3, 8
  %s25 = scalar_lea.vmem %s1, 8
  %v26 = vld [vmem:[%s25] sm:$0xff]
  %27 = vst [vmem:[%s24] sm:$0xff] %v26
  %s28 = scalar_lea.vmem %s3, 16
  %s29 = scalar_lea.vmem %s1, 16
  %v30 = vld [vmem:[%s29] sm:$0xff]
  %31 = vst [vmem:[%s28] sm:$0xff] %v30
  %s32 = scalar_lea.vmem %s3, 24
  %s33 = scalar_lea.vmem %s1, 24
  %v34 = vld [vmem:[%s33] sm:$0xff]
  %35 = vst [vmem:[%s32] sm:$0xff] %v34
  %s36 = scalar_lea.vmem %s3, 32
  %s37 = scalar_lea.vmem %s1, 32
  %v38 = vld [vmem:[%s37] sm:$0xff]
  %39 = vst [vmem:[%s36] sm:$0xff] %v38

// kernel: cmm.1
$region0: #{cmm.1}
  #allocation0 [shape = 'u32[]', space=smem, size = 0x4, offset = 0x4, fixed_abs, tag = 'smem constant byte address 0x4 - core index']
  #allocation1 [shape = 'u32[72,128]{1,0:T(1,128)}', space=vmem, size = 0x9000, scoped, tag = 'internal scratch']
  %s0 = inlined_call_operand.vmem [shape: f32[5,7,128], index: 0, kind: input, shape index: {}]
  %s1 = inlined_call_operand.vmem [shape: f32[5,7,128], index: 1, kind: input, shape index: {}]
  %s2 = inlined_call_operand.vmem [shape: f32[7,6,128], index: 2, kind: input, shape index: {}]
  %s3 = inlined_call_operand.vmem [shape: f32[7,6,128], index: 3, kind: input, shape index: {}]
  %s4 = inlined_call_operand.vmem [shape: f32[5,6,128], index: 4, kind: output, shape index: {0}]
  %s5 = inlined_call_operand.vmem [shape: f32[5,6,128], index: 5, kind: output, shape index: {1}]
  %6 = xla_tuple %s4, %s5
  %s7 = sld [smem:[#allocation0]]
  $region34: #{cmm.1} parent=0
    _
  %s9 = ssub.s32 1, %s7
  %s10 = scalar_select 0, %s9, %s7
  // Predicated region
  $region2: #{cmm.1} parent=0 // pred_check
    _
  $region3: #{cmm.1} parent=0 // pred_check_branch
    %12 = sbr.rel (0) target = $region5
  $region4: #{cmm.1} parent=0 // pred_region
    _
  $region5: #{cmm.1} parent=0 // pred_fallthru
    _
  // Predicated region
  $region6: #{cmm.1} parent=0 // pred_check
    _
  $region7: #{cmm.1} parent=0 // pred_check_branch
    %14 = sbr.rel (0) target = $region9
  $region8: #{cmm.1} parent=0 // pred_region
    _
  $region9: #{cmm.1} parent=0 // pred_fallthru
    _
  // Predicated region
  $region10: #{cmm.1} parent=0 // pred_check
    _
  $region11: #{cmm.1} parent=0 // pred_check_branch
    %16 = sbr.rel (0) target = $region13
  $region12: #{cmm.1} parent=0 // pred_region
    _
  $region13: #{cmm.1} parent=0 // pred_fallthru
    _
  // Predicated region
  $region14: #{cmm.1} parent=0 // pred_check
    _
  $region15: #{cmm.1} parent=0 // pred_check_branch
    %18 = sbr.rel (0) target = $region17
  $region16: #{cmm.1} parent=0 // pred_region
    _
  $region17: #{cmm.1} parent=0 // pred_fallthru
    _
  %v19 = vld [vmem:[%s0] sm:$0x7f]
  %v20 = vld [vmem:[%s0 + $0x8] sm:$0x7f]
  %v21 = vld [vmem:[%s0 + $0x10] sm:$0x7f]
  %v22 = vld [vmem:[%s0 + $0x18] sm:$0x7f]
  %v23 = vld [vmem:[%s0 + $0x20] sm:$0x7f]
  %v24 = vld [vmem:[%s1] sm:$0x7f]
  %v25 = vld [vmem:[%s1 + $0x8] sm:$0x7f]
  %v26 = vld [vmem:[%s1 + $0x10] sm:$0x7f]
  %v27 = vld [vmem:[%s1 + $0x18] sm:$0x7f]
  %v28 = vld [vmem:[%s1 + $0x20] sm:$0x7f]
  %v29 = vld [vmem:[%s2] sm:$0x3f]
  %v30 = vld [vmem:[%s2 + $0x8] sm:$0x3f]
  %v31 = vld [vmem:[%s2 + $0x10] sm:$0x3f]
  %v32 = vld [vmem:[%s2 + $0x18] sm:$0x3f]
  %v33 = vld [vmem:[%s2 + $0x20] sm:$0x3f]
  %v34 = vld [vmem:[%s2 + $0x28] sm:$0x3f]
  %v35 = vld [vmem:[%s2 + $0x30] sm:$0x3f]
  %v36 = vld [vmem:[%s3] sm:$0x3f]
  %v37 = vld [vmem:[%s3 + $0x8] sm:$0x3f]
  %v38 = vld [vmem:[%s3 + $0x10] sm:$0x3f]
  %v39 = vld [vmem:[%s3 + $0x18] sm:$0x3f]
  %v40 = vld [vmem:[%s3 + $0x20] sm:$0x3f]
  %v41 = vld [vmem:[%s3 + $0x28] sm:$0x3f]
  %v42 = vld [vmem:[%s3 + $0x30] sm:$0x3f]
  %v43 = vperm.slane %v19, 0
  %v44 = vperm.slane %v20, 0
  %v45 = vperm.slane %v21, 0
  %v46 = vperm.slane %v22, 0
  %v47 = vperm.slane %v23, 0
  %v48 = vmul.f32 %v43, %v29
  %v49 = vmul.f32 %v44, %v29
  %v50 = vmul.f32 %v45, %v29
  %v51 = vmul.f32 %v46, %v29
  %v52 = vmul.f32 %v47, %v29
  %v53 = vadd.f32 %v48, 0.0
  %v54 = vadd.f32 %v49, 0.0
  %v55 = vadd.f32 %v50, 0.0
  %v56 = vadd.f32 %v51, 0.0
  %v57 = vadd.f32 %v52, 0.0
  %v58 = vperm.slane %v24, 0
  %v59 = vperm.slane %v25, 0
  %v60 = vperm.slane %v26, 0
  %v61 = vperm.slane %v27, 0
  %v62 = vperm.slane %v28, 0
  %v63 = vmul.f32 %v58, %v36
  %v64 = vmul.f32 %v59, %v36
  %v65 = vmul.f32 %v60, %v36
  %v66 = vmul.f32 %v61, %v36
  %v67 = vmul.f32 %v62, %v36
  %v68 = vsub.f32 %v53, %v63
  %v69 = vsub.f32 %v54, %v64
  %v70 = vsub.f32 %v55, %v65
  %v71 = vsub.f32 %v56, %v66
  %v72 = vsub.f32 %v57, %v67
  %v73 = vmul.f32 %v43, %v36
  %v74 = vmul.f32 %v44, %v36
  %v75 = vmul.f32 %v45, %v36
  %v76 = vmul.f32 %v46, %v36
  %v77 = vmul.f32 %v47, %v36
  %v78 = vadd.f32 %v73, 0.0
  %v79 = vadd.f32 %v74, 0.0
  %v80 = vadd.f32 %v75, 0.0
  %v81 = vadd.f32 %v76, 0.0
  %v82 = vadd.f32 %v77, 0.0
  %v83 = vmul.f32 %v58, %v29
  %v84 = vmul.f32 %v59, %v29
  %v85 = vmul.f32 %v60, %v29
  %v86 = vmul.f32 %v61, %v29
  %v87 = vmul.f32 %v62, %v29
  %v88 = vadd.f32 %v78, %v83
  %v89 = vadd.f32 %v79, %v84
  %v90 = vadd.f32 %v80, %v85
  %v91 = vadd.f32 %v81, %v86
  %v92 = vadd.f32 %v82, %v87
  %v93 = vperm.slane %v19, 1
  %v94 = vperm.slane %v20, 1
  %v95 = vperm.slane %v21, 1
  %v96 = vperm.slane %v22, 1
  %v97 = vperm.slane %v23, 1
  %v98 = vmul.f32 %v93, %v30
  %v99 = vmul.f32 %v94, %v30
  %v100 = vmul.f32 %v95, %v30
  %v101 = vmul.f32 %v96, %v30
  %v102 = vmul.f32 %v97, %v30
  %v103 = vadd.f32 %v68, %v98
  %v104 = vadd.f32 %v69, %v99
  %v105 = vadd.f32 %v70, %v100
  %v106 = vadd.f32 %v71, %v101
  %v107 = vadd.f32 %v72, %v102
  %v108 = vperm.slane %v24, 1
  %v109 = vperm.slane %v25, 1
  %v110 = vperm.slane %v26, 1
  %v111 = vperm.slane %v27, 1
  %v112 = vperm.slane %v28, 1
  %v113 = vmul.f32 %v108, %v37
  %v114 = vmul.f32 %v109, %v37
  %v115 = vmul.f32 %v110, %v37
  %v116 = vmul.f32 %v111, %v37
  %v117 = vmul.f32 %v112, %v37
  %v118 = vsub.f32 %v103, %v113
  %v119 = vsub.f32 %v104, %v114
  %v120 = vsub.f32 %v105, %v115
  %v121 = vsub.f32 %v106, %v116
  %v122 = vsub.f32 %v107, %v117
  %v123 = vmul.f32 %v93, %v37
  %v124 = vmul.f32 %v94, %v37
  %v125 = vmul.f32 %v95, %v37
  %v126 = vmul.f32 %v96, %v37
  %v127 = vmul.f32 %v97, %v37
  %v128 = vadd.f32 %v88, %v123
  %v129 = vadd.f32 %v89, %v124
  %v130 = vadd.f32 %v90, %v125
  %v131 = vadd.f32 %v91, %v126
  %v132 = vadd.f32 %v92, %v127
  %v133 = vmul.f32 %v108, %v30
  %v134 = vmul.f32 %v109, %v30
  %v135 = vmul.f32 %v110, %v30
  %v136 = vmul.f32 %v111, %v30
  %v137 = vmul.f32 %v112, %v30
  %v138 = vadd.f32 %v128, %v133
  %v139 = vadd.f32 %v129, %v134
  %v140 = vadd.f32 %v130, %v135
  %v141 = vadd.f32 %v131, %v136
  %v142 = vadd.f32 %v132, %v137
  %v143 = vperm.slane %v19, 2
  %v144 = vperm.slane %v20, 2
  %v145 = vperm.slane %v21, 2
  %v146 = vperm.slane %v22, 2
  %v147 = vperm.slane %v23, 2
  %v148 = vmul.f32 %v143, %v31
  %v149 = vmul.f32 %v144, %v31
  %v150 = vmul.f32 %v145, %v31
  %v151 = vmul.f32 %v146, %v31
  %v152 = vmul.f32 %v147, %v31
  %v153 = vadd.f32 %v118, %v148
  %v154 = vadd.f32 %v119, %v149
  %v155 = vadd.f32 %v120, %v150
  %v156 = vadd.f32 %v121, %v151
  %v157 = vadd.f32 %v122, %v152
  %v158 = vperm.slane %v24, 2
  %v159 = vperm.slane %v25, 2
  %v160 = vperm.slane %v26, 2
  %v161 = vperm.slane %v27, 2
  %v162 = vperm.slane %v28, 2
  %v163 = vmul.f32 %v158, %v38
  %v164 = vmul.f32 %v159, %v38
  %v165 = vmul.f32 %v160, %v38
  %v166 = vmul.f32 %v161, %v38
  %v167 = vmul.f32 %v162, %v38
  %v168 = vsub.f32 %v153, %v163
  %v169 = vsub.f32 %v154, %v164
  %v170 = vsub.f32 %v155, %v165
  %v171 = vsub.f32 %v156, %v166
  %v172 = vsub.f32 %v157, %v167
  %v173 = vmul.f32 %v143, %v38
  %v174 = vmul.f32 %v144, %v38
  %v175 = vmul.f32 %v145, %v38
  %v176 = vmul.f32 %v146, %v38
  %v177 = vmul.f32 %v147, %v38
  %v178 = vadd.f32 %v138, %v173
  %v179 = vadd.f32 %v139, %v174
  %v180 = vadd.f32 %v140, %v175
  %v181 = vadd.f32 %v141, %v176
  %v182 = vadd.f32 %v142, %v177
  %v183 = vmul.f32 %v158, %v31
  %v184 = vmul.f32 %v159, %v31
  %v185 = vmul.f32 %v160, %v31
  %v186 = vmul.f32 %v161, %v31
  %v187 = vmul.f32 %v162, %v31
  %v188 = vadd.f32 %v178, %v183
  %v189 = vadd.f32 %v179, %v184
  %v190 = vadd.f32 %v180, %v185
  %v191 = vadd.f32 %v181, %v186
  %v192 = vadd.f32 %v182, %v187
  %v193 = vperm.slane %v19, 3
  %v194 = vperm.slane %v20, 3
  %v195 = vperm.slane %v21, 3
  %v196 = vperm.slane %v22, 3
  %v197 = vperm.slane %v23, 3
  %v198 = vmul.f32 %v193, %v32
  %v199 = vmul.f32 %v194, %v32
  %v200 = vmul.f32 %v195, %v32
  %v201 = vmul.f32 %v196, %v32
  %v202 = vmul.f32 %v197, %v32
  %v203 = vadd.f32 %v168, %v198
  %v204 = vadd.f32 %v169, %v199
  %v205 = vadd.f32 %v170, %v200
  %v206 = vadd.f32 %v171, %v201
  %v207 = vadd.f32 %v172, %v202
  %v208 = vperm.slane %v24, 3
  %v209 = vperm.slane %v25, 3
  %v210 = vperm.slane %v26, 3
  %v211 = vperm.slane %v27, 3
  %v212 = vperm.slane %v28, 3
  %v213 = vmul.f32 %v208, %v39
  %v214 = vmul.f32 %v209, %v39
  %v215 = vmul.f32 %v210, %v39
  %v216 = vmul.f32 %v211, %v39
  %v217 = vmul.f32 %v212, %v39
  %v218 = vsub.f32 %v203, %v213
  %v219 = vsub.f32 %v204, %v214
  %v220 = vsub.f32 %v205, %v215
  %v221 = vsub.f32 %v206, %v216
  %v222 = vsub.f32 %v207, %v217
  %v223 = vmul.f32 %v193, %v39
  %v224 = vmul.f32 %v194, %v39
  %v225 = vmul.f32 %v195, %v39
  %v226 = vmul.f32 %v196, %v39
  %v227 = vmul.f32 %v197, %v39
  %v228 = vadd.f32 %v188, %v223
  %v229 = vadd.f32 %v189, %v224
  %v230 = vadd.f32 %v190, %v225
  %v231 = vadd.f32 %v191, %v226
  %v232 = vadd.f32 %v192, %v227
  %v233 = vmul.f32 %v208, %v32
  %v234 = vmul.f32 %v209, %v32
  %v235 = vmul.f32 %v210, %v32
  %v236 = vmul.f32 %v211, %v32
  %v237 = vmul.f32 %v212, %v32
  %v238 = vadd.f32 %v228, %v233
  %v239 = vadd.f32 %v229, %v234
  %v240 = vadd.f32 %v230, %v235
  %v241 = vadd.f32 %v231, %v236
  %v242 = vadd.f32 %v232, %v237
  %v243 = vperm.slane %v19, 4
  %v244 = vperm.slane %v20, 4
  %v245 = vperm.slane %v21, 4
  %v246 = vperm.slane %v22, 4
  %v247 = vperm.slane %v23, 4
  %v248 = vmul.f32 %v243, %v33
  %v249 = vmul.f32 %v244, %v33
  %v250 = vmul.f32 %v245, %v33
  %v251 = vmul.f32 %v246, %v33
  %v252 = vmul.f32 %v247, %v33
  %v253 = vadd.f32 %v218, %v248
  %v254 = vadd.f32 %v219, %v249
  %v255 = vadd.f32 %v220, %v250
  %v256 = vadd.f32 %v221, %v251
  %v257 = vadd.f32 %v222, %v252
  %v258 = vperm.slane %v24, 4
  %v259 = vperm.slane %v25, 4
  %v260 = vperm.slane %v26, 4
  %v261 = vperm.slane %v27, 4
  %v262 = vperm.slane %v28, 4
  %v263 = vmul.f32 %v258, %v40
  %v264 = vmul.f32 %v259, %v40
  %v265 = vmul.f32 %v260, %v40
  %v266 = vmul.f32 %v261, %v40
  %v267 = vmul.f32 %v262, %v40
  %v268 = vsub.f32 %v253, %v263
  %v269 = vsub.f32 %v254, %v264
  %v270 = vsub.f32 %v255, %v265
  %v271 = vsub.f32 %v256, %v266
  %v272 = vsub.f32 %v257, %v267
  %v273 = vmul.f32 %v243, %v40
  %v274 = vmul.f32 %v244, %v40
  %v275 = vmul.f32 %v245, %v40
  %v276 = vmul.f32 %v246, %v40
  %v277 = vmul.f32 %v247, %v40
  %v278 = vadd.f32 %v238, %v273
  %v279 = vadd.f32 %v239, %v274
  %v280 = vadd.f32 %v240, %v275
  %v281 = vadd.f32 %v241, %v276
  %v282 = vadd.f32 %v242, %v277
  %v283 = vmul.f32 %v258, %v33
  %v284 = vmul.f32 %v259, %v33
  %v285 = vmul.f32 %v260, %v33
  %v286 = vmul.f32 %v261, %v33
  %v287 = vmul.f32 %v262, %v33
  %v288 = vadd.f32 %v278, %v283
  %v289 = vadd.f32 %v279, %v284
  %v290 = vadd.f32 %v280, %v285
  %v291 = vadd.f32 %v281, %v286
  %v292 = vadd.f32 %v282, %v287
  %v293 = vperm.slane %v19, 5
  %v294 = vperm.slane %v20, 5
  %v295 = vperm.slane %v21, 5
  %v296 = vperm.slane %v22, 5
  %v297 = vperm.slane %v23, 5
  %v298 = vmul.f32 %v293, %v34
  %v299 = vmul.f32 %v294, %v34
  %v300 = vmul.f32 %v295, %v34
  %v301 = vmul.f32 %v296, %v34
  %v302 = vmul.f32 %v297, %v34
  %v303 = vadd.f32 %v268, %v298
  %v304 = vadd.f32 %v269, %v299
  %v305 = vadd.f32 %v270, %v300
  %v306 = vadd.f32 %v271, %v301
  %v307 = vadd.f32 %v272, %v302
  %v308 = vperm.slane %v24, 5
  %v309 = vperm.slane %v25, 5
  %v310 = vperm.slane %v26, 5
  %v311 = vperm.slane %v27, 5
  %v312 = vperm.slane %v28, 5
  %v313 = vmul.f32 %v308, %v41
  %v314 = vmul.f32 %v309, %v41
  %v315 = vmul.f32 %v310, %v41
  %v316 = vmul.f32 %v311, %v41
  %v317 = vmul.f32 %v312, %v41
  %v318 = vsub.f32 %v303, %v313
  %v319 = vsub.f32 %v304, %v314
  %v320 = vsub.f32 %v305, %v315
  %v321 = vsub.f32 %v306, %v316
  %v322 = vsub.f32 %v307, %v317
  %v323 = vmul.f32 %v293, %v41
  %v324 = vmul.f32 %v294, %v41
  %v325 = vmul.f32 %v295, %v41
  %v326 = vmul.f32 %v296, %v41
  %v327 = vmul.f32 %v297, %v41
  %v328 = vadd.f32 %v288, %v323
  %v329 = vadd.f32 %v289, %v324
  %v330 = vadd.f32 %v290, %v325
  %v331 = vadd.f32 %v291, %v326
  %v332 = vadd.f32 %v292, %v327
  %v333 = vmul.f32 %v308, %v34
  %v334 = vmul.f32 %v309, %v34
  %v335 = vmul.f32 %v310, %v34
  %v336 = vmul.f32 %v311, %v34
  %v337 = vmul.f32 %v312, %v34
  %v338 = vadd.f32 %v328, %v333
  %v339 = vadd.f32 %v329, %v334
  %v340 = vadd.f32 %v330, %v335
  %v341 = vadd.f32 %v331, %v336
  %v342 = vadd.f32 %v332, %v337
  %v343 = vperm.slane %v19, 6
  %v344 = vperm.slane %v20, 6
  %v345 = vperm.slane %v21, 6
  %v346 = vperm.slane %v22, 6
  %v347 = vperm.slane %v23, 6
  %v348 = vmul.f32 %v343, %v35
  %v349 = vmul.f32 %v344, %v35
  %v350 = vmul.f32 %v345, %v35
  %v351 = vmul.f32 %v346, %v35
  %v352 = vmul.f32 %v347, %v35
  %v353 = vadd.f32 %v318, %v348
  %v354 = vadd.f32 %v319, %v349
  %v355 = vadd.f32 %v320, %v350
  %v356 = vadd.f32 %v321, %v351
  %v357 = vadd.f32 %v322, %v352
  %v358 = vperm.slane %v24, 6
  %v359 = vperm.slane %v25, 6
  %v360 = vperm.slane %v26, 6
  %v361 = vperm.slane %v27, 6
  %v362 = vperm.slane %v28, 6
  %v363 = vmul.f32 %v358, %v42
  %v364 = vmul.f32 %v359, %v42
  %v365 = vmul.f32 %v360, %v42
  %v366 = vmul.f32 %v361, %v42
  %v367 = vmul.f32 %v362, %v42
  %v368 = vsub.f32 %v353, %v363
  %v369 = vsub.f32 %v354, %v364
  %v370 = vsub.f32 %v355, %v365
  %v371 = vsub.f32 %v356, %v366
  %v372 = vsub.f32 %v357, %v367
  %v373 = vmul.f32 %v343, %v42
  %v374 = vmul.f32 %v344, %v42
  %v375 = vmul.f32 %v345, %v42
  %v376 = vmul.f32 %v346, %v42
  %v377 = vmul.f32 %v347, %v42
  %v378 = vadd.f32 %v338, %v373
  %v379 = vadd.f32 %v339, %v374
  %v380 = vadd.f32 %v340, %v375
  %v381 = vadd.f32 %v341, %v376
  %v382 = vadd.f32 %v342, %v377
  %v383 = vmul.f32 %v358, %v35
  %v384 = vmul.f32 %v359, %v35
  %v385 = vmul.f32 %v360, %v35
  %v386 = vmul.f32 %v361, %v35
  %v387 = vmul.f32 %v362, %v35
  %v388 = vadd.f32 %v378, %v383
  %v389 = vadd.f32 %v379, %v384
  %v390 = vadd.f32 %v380, %v385
  %v391 = vadd.f32 %v381, %v386
  %v392 = vadd.f32 %v382, %v387
  %393 = vst [vmem:[%s4] sm:$0x3f] %v368
  %394 = vst [vmem:[%s4 + $0x8] sm:$0x3f] %v369
  %395 = vst [vmem:[%s4 + $0x10] sm:$0x3f] %v370
  %396 = vst [vmem:[%s4 + $0x18] sm:$0x3f] %v371
  %397 = vst [vmem:[%s4 + $0x20] sm:$0x3f] %v372
  %398 = vst [vmem:[%s5] sm:$0x3f] %v388
  %399 = vst [vmem:[%s5 + $0x8] sm:$0x3f] %v389
  %400 = vst [vmem:[%s5 + $0x10] sm:$0x3f] %v390
  %401 = vst [vmem:[%s5 + $0x18] sm:$0x3f] %v391
  %402 = vst [vmem:[%s5 + $0x20] sm:$0x3f] %v392
  // Predicated region
  $region18: #{cmm.1} parent=0 // pred_check
    _
  $region19: #{cmm.1} parent=0 // pred_check_branch
    %404 = sbr.rel (0) target = $region21
  $region20: #{cmm.1} parent=0 // pred_region
    _
  $region21: #{cmm.1} parent=0 // pred_fallthru
    _
  // Predicated region
  $region22: #{cmm.1} parent=0 // pred_check
    _
  $region23: #{cmm.1} parent=0 // pred_check_branch
    %406 = sbr.rel (0) target = $region25
  $region24: #{cmm.1} parent=0 // pred_region
    _
  $region25: #{cmm.1} parent=0 // pred_fallthru
    _
  // Predicated region
  $region26: #{cmm.1} parent=0 // pred_check
    _
  $region27: #{cmm.1} parent=0 // pred_check_branch
    %408 = sbr.rel (0) target = $region29
  $region28: #{cmm.1} parent=0 // pred_region
    _
  $region29: #{cmm.1} parent=0 // pred_fallthru
    _
  // Predicated region
  $region30: #{cmm.1} parent=0 // pred_check
    _
  $region31: #{cmm.1} parent=0 // pred_check_branch
    %410 = sbr.rel (0) target = $region33
  $region32: #{cmm.1} parent=0 // pred_region
    _
  $region33: #{cmm.1} parent=0 // pred_fallthru
    _

</llo_original>
